<compile_context>
chip_gen: v5e
topology: v5e:2x2
jax: 0.10.0
libtpu: 0.0.40
codegen_flags: <defaults>
</compile_context>

<pallas_src>
import jax
import jax.numpy as jnp
from jax.experimental import pallas as pl
from jax.experimental.pallas import tpu as pltpu

# ----- problem sizes (small, consistent with the module) -----
B = 2          # batch
S = 8          # sequence length
BS = B * S     # rows processed in one slab
D_IN = 16      # input_dim
H = 32         # hidden_dim
NB = 3         # num_blocks
K = 3          # kernel_size
EPS = 1e-5
NEG_SLOPE = 0.2


def discriminator_kernel(x_ref, w_in_ref, b_in_ref,
                         w3_ref, bconv_ref,
                         scale_ref, shift_ref,
                         wfin_ref, bfin_ref,
                         out_ref):
    # x_ref: (BS, D_IN)   out_ref: (BS, 1)
    x = x_ref[...]

    # input projection: Linear(D_IN -> H)   (dropout = identity in eval mode)
    h = jnp.dot(x, w_in_ref[...], preferred_element_type=jnp.float32) + b_in_ref[...]   # (BS, H)

    # per-sequence edge masks, hoisted out of the block loop (rows are b*S + s):
    #   prev contribution is invalid at s == 0, next contribution invalid at s == S-1.
    row = jax.lax.broadcasted_iota(jnp.int32, (BS, 1), 0)
    s_idx = row % S
    prev_mask = (s_idx != 0).astype(jnp.float32)          # (BS, 1)
    next_mask = (s_idx != S - 1).astype(jnp.float32)      # (BS, 1)

    bconv = bconv_ref[...]     # (NB, H)
    scale = scale_ref[...]     # (NB, H)  = gamma * rsqrt(var + eps)
    shift = shift_ref[...]     # (NB, H)  = beta - mean * scale

    for blk in range(NB):
        # Conv1d(H->H, k=3, padding=1) over the sequence axis, channels-last:
        # one fused matmul against [W0 | W1 | W2], then align taps with sublane rolls.
        m = jnp.dot(h, w3_ref[blk], preferred_element_type=jnp.float32)   # (BS, 3H)
        m_prev = pltpu.roll(m[:, :H], 1, axis=0)            # row r gets m0[r-1]
        m_next = pltpu.roll(m[:, 2 * H:], BS - 1, axis=0)   # row r gets m2[r+1]
        c = prev_mask * m_prev + m[:, H:2 * H] + next_mask * m_next + bconv[blk]

        # LeakyReLU(0.2)
        a = jnp.maximum(c, NEG_SLOPE * c)

        # eval-mode BatchNorm folded to scale/shift; dropout = identity; residual add
        h = h + a * scale[blk] + shift[blk]

    # final Linear(H -> 1) as VPU multiply + lane reduce, then sigmoid
    logits = jnp.sum(h * wfin_ref[...], axis=-1, keepdims=True) + bfin_ref[...]   # (BS, 1)
    out_ref[...] = jax.nn.sigmoid(logits)


def discriminator_forward(x, params):
    (w_in, b_in, w_conv, b_conv, gamma, beta, mean, var, w_fin, b_fin) = params

    # parameter folding done once in the wrapper (outside the kernel):
    #  - conv taps concatenated column-wise -> (NB, H, 3H) so each block is ONE matmul
    #  - BatchNorm (eval) folded into per-channel scale/shift
    w3 = jnp.transpose(w_conv, (0, 2, 1, 3)).reshape(NB, H, K * H)   # columns [W0 | W1 | W2]
    bn_scale = gamma * jax.lax.rsqrt(var + EPS)                      # (NB, H)
    bn_shift = beta - mean * bn_scale                                # (NB, H)
    w_fin_row = w_fin.reshape(1, H)                                  # (1, H)
    x2 = x.reshape(BS, D_IN)                                         # fold batch into M

    out = pl.pallas_call(
        discriminator_kernel,
        out_shape=jax.ShapeDtypeStruct((BS, 1), jnp.float32),
        # no grid: single invocation, full arrays resident in VMEM (footprint < 100 KB)
    )(x2, w_in, b_in, w3, b_conv, bn_scale, bn_shift, w_fin_row, b_fin)

    return out.reshape(B, S)


def reference_forward(x, params):
    (w_in, b_in, w_conv, b_conv, gamma, beta, mean, var, w_fin, b_fin) = params
    h = x @ w_in + b_in                                        # (B, S, H)
    for blk in range(NB):
        hp = jnp.pad(h, ((0, 0), (1, 1), (0, 0)))
        c = (hp[:, :-2] @ w_conv[blk, 0]
             + hp[:, 1:-1] @ w_conv[blk, 1]
             + hp[:, 2:] @ w_conv[blk, 2]) + b_conv[blk]
        a = jnp.where(c >= 0, c, NEG_SLOPE * c)
        bn = (a - mean[blk]) * jax.lax.rsqrt(var[blk] + EPS) * gamma[blk] + beta[blk]
        h = h + bn
    logits = h @ w_fin + b_fin
    return jax.nn.sigmoid(logits)[..., 0]


def init_params(key):
    ks = jax.random.split(key, 8)
    scale = 0.1
    w_in = scale * jax.random.normal(ks[0], (D_IN, H), jnp.float32)       # Linear(D_IN,H).weight.T
    b_in = scale * jax.random.normal(ks[1], (1, H), jnp.float32)
    # conv weights stored as (NB, K, C_in, C_out) == transpose of PyTorch (C_out, C_in, K)
    w_conv = scale * jax.random.normal(ks[2], (NB, K, H, H), jnp.float32)
    b_conv = scale * jax.random.normal(ks[3], (NB, H), jnp.float32)
    gamma = 1.0 + scale * jax.random.normal(ks[4], (NB, H), jnp.float32)
    beta = scale * jax.random.normal(ks[5], (NB, H), jnp.float32)
    mean = scale * jax.random.normal(ks[6], (NB, H), jnp.float32)
    var = jnp.abs(1.0 + scale * jax.random.normal(ks[7], (NB, H), jnp.float32))
    w_fin = scale * jax.random.normal(ks[0], (H, 1), jnp.float32)          # Linear(H,1).weight.T
    b_fin = scale * jax.random.normal(ks[1], (1, 1), jnp.float32)
    return (w_in, b_in, w_conv, b_conv, gamma, beta, mean, var, w_fin, b_fin)


if __name__ == "__main__":
    key = jax.random.PRNGKey(0)
    k_x, k_p = jax.random.split(key)
    x = jax.random.normal(k_x, (B, S, D_IN), jnp.float32)
    params = init_params(k_p)

    out = discriminator_forward(x, params)
    out = jax.block_until_ready(out)

    ref = reference_forward(x, params)
    assert out.shape == (B, S), out.shape
    assert jnp.allclose(out, ref, rtol=1e-4, atol=1e-4), jnp.max(jnp.abs(out - ref))

    print("KERNEL_OK")
</pallas_src>

<mosaic_0001>
module attributes {stable_mosaic.version = 11 : i64} {
  func.func @discriminator_kernel(%arg0: memref<16x16xf32, #tpu.memory_space<vmem>>, %arg1: memref<16x32xf32, #tpu.memory_space<vmem>>, %arg2: memref<1x32xf32, #tpu.memory_space<vmem>>, %arg3: memref<3x32x96xf32, #tpu.memory_space<vmem>>, %arg4: memref<3x32xf32, #tpu.memory_space<vmem>>, %arg5: memref<3x32xf32, #tpu.memory_space<vmem>>, %arg6: memref<3x32xf32, #tpu.memory_space<vmem>>, %arg7: memref<1x32xf32, #tpu.memory_space<vmem>>, %arg8: memref<1x1xf32, #tpu.memory_space<vmem>>, %arg9: memref<16x1xf32, #tpu.memory_space<vmem>>) attributes {dimension_semantics = [], scalar_prefetch = 0 : i64, scratch_operands = 0 : i64, tpu.core_type = #tpu.core_type<tc>} {
    %c0 = arith.constant 0 : index
    %c0_0 = arith.constant 0 : index
    %0 = vector.load %arg0[%c0, %c0_0] : memref<16x16xf32, #tpu.memory_space<vmem>>, vector<16x16xf32>
    %c0_1 = arith.constant 0 : index
    %c0_2 = arith.constant 0 : index
    %1 = vector.load %arg1[%c0_1, %c0_2] : memref<16x32xf32, #tpu.memory_space<vmem>>, vector<16x32xf32>
    %cst = arith.constant dense<0.000000e+00> : vector<16x32xf32>
    %2 = tpu.matmul %0, %1, %cst {dimension_numbers = #tpu.dot_dimension_numbers<[1], [0], [0], [1], [0, 0, 1, 1], [], []>} : vector<16x16xf32>, vector<16x32xf32>, vector<16x32xf32> -> vector<16x32xf32>
    %c0_3 = arith.constant 0 : index
    %c0_4 = arith.constant 0 : index
    %3 = vector.load %arg2[%c0_3, %c0_4] : memref<1x32xf32, #tpu.memory_space<vmem>>, vector<1x32xf32>
    %4 = vector.broadcast %3 : vector<1x32xf32> to vector<16x32xf32>
    %5 = arith.addf %2, %4 : vector<16x32xf32>
    %6 = tpu.iota {dimensions = array<i32: 0>} : vector<16x1xi32>
    %c8_i32 = arith.constant 8 : i32
    %c0_i32 = arith.constant 0 : i32
    %7 = arith.cmpi eq, %c8_i32, %c0_i32 : i32
    %c1_i32 = arith.constant 1 : i32
    %8 = arith.select %7, %c1_i32, %c8_i32 : i32
    %9 = vector.broadcast %8 : i32 to vector<16x1xi32>
    %10 = arith.remsi %6, %9 : vector<16x1xi32>
    %c0_i32_5 = arith.constant 0 : i32
    %11 = vector.broadcast %c0_i32_5 : i32 to vector<16x1xi32>
    %12 = arith.cmpi ne, %10, %11 : vector<16x1xi32>
    %c0_i32_6 = arith.constant 0 : i32
    %13 = vector.broadcast %c0_i32_6 : i32 to vector<16x1xi32>
    %14 = arith.cmpi slt, %10, %13 : vector<16x1xi32>
    %c0_i32_7 = arith.constant 0 : i32
    %15 = arith.cmpi slt, %8, %c0_i32_7 : i32
    %16 = vector.broadcast %15 : i1 to vector<16x1xi1>
    %17 = vector.broadcast %16 : vector<16x1xi1> to vector<16x1xi1>
    %18 = arith.xori %14, %17 : vector<16x1xi1>
    %19 = arith.andi %18, %12 : vector<16x1xi1>
    %20 = vector.broadcast %8 : i32 to vector<16x1xi32>
    %21 = arith.addi %10, %20 : vector<16x1xi32>
    %22 = arith.select %19, %21, %10 : vector<16x1xi1>, vector<16x1xi32>
    %c0_i32_8 = arith.constant 0 : i32
    %23 = vector.broadcast %c0_i32_8 : i32 to vector<16x1xi32>
    %24 = arith.cmpi ne, %22, %23 : vector<16x1xi32>
    %25 = arith.extui %24 : vector<16x1xi1> to vector<16x1xi32>
    %26 = arith.sitofp %25 : vector<16x1xi32> to vector<16x1xf32>
    %c7_i32 = arith.constant 7 : i32
    %27 = vector.broadcast %c7_i32 : i32 to vector<16x1xi32>
    %28 = arith.cmpi ne, %22, %27 : vector<16x1xi32>
    %29 = arith.extui %28 : vector<16x1xi1> to vector<16x1xi32>
    %30 = arith.sitofp %29 : vector<16x1xi32> to vector<16x1xf32>
    %c0_9 = arith.constant 0 : index
    %c0_10 = arith.constant 0 : index
    %31 = vector.load %arg4[%c0_9, %c0_10] : memref<3x32xf32, #tpu.memory_space<vmem>>, vector<3x32xf32>
    %c0_11 = arith.constant 0 : index
    %c0_12 = arith.constant 0 : index
    %32 = vector.load %arg5[%c0_11, %c0_12] : memref<3x32xf32, #tpu.memory_space<vmem>>, vector<3x32xf32>
    %c0_13 = arith.constant 0 : index
    %c0_14 = arith.constant 0 : index
    %33 = vector.load %arg6[%c0_13, %c0_14] : memref<3x32xf32, #tpu.memory_space<vmem>>, vector<3x32xf32>
    %c0_15 = arith.constant 0 : index
    %c0_16 = arith.constant 0 : index
    %c0_17 = arith.constant 0 : index
    %34 = vector.load %arg3[%c0_15, %c0_16, %c0_17] : memref<3x32x96xf32, #tpu.memory_space<vmem>>, vector<1x32x96xf32>
    %35 = vector.shape_cast %34 : vector<1x32x96xf32> to vector<32x96xf32>
    %cst_18 = arith.constant dense<0.000000e+00> : vector<16x96xf32>
    %36 = tpu.matmul %5, %35, %cst_18 {dimension_numbers = #tpu.dot_dimension_numbers<[1], [0], [0], [1], [0, 0, 1, 1], [], []>} : vector<16x32xf32>, vector<32x96xf32>, vector<16x96xf32> -> vector<16x96xf32>
    %37 = vector.extract_strided_slice %36 {offsets = [0, 0], sizes = [16, 32], strides = [1, 1]} : vector<16x96xf32> to vector<16x32xf32>
    %c1_i32_19 = arith.constant 1 : i32
    %38 = tpu.dynamic_rotate %37 by %c1_i32_19 dim 0 : vector<16x32xf32>, i32 -> vector<16x32xf32>
    %39 = vector.extract_strided_slice %36 {offsets = [0, 64], sizes = [16, 32], strides = [1, 1]} : vector<16x96xf32> to vector<16x32xf32>
    %c15_i32 = arith.constant 15 : i32
    %40 = tpu.dynamic_rotate %39 by %c15_i32 dim 0 : vector<16x32xf32>, i32 -> vector<16x32xf32>
    %41 = vector.broadcast %26 : vector<16x1xf32> to vector<16x32xf32>
    %42 = arith.mulf %41, %38 : vector<16x32xf32>
    %43 = vector.extract_strided_slice %36 {offsets = [0, 32], sizes = [16, 32], strides = [1, 1]} : vector<16x96xf32> to vector<16x32xf32>
    %44 = arith.addf %42, %43 : vector<16x32xf32>
    %45 = vector.broadcast %30 : vector<16x1xf32> to vector<16x32xf32>
    %46 = arith.mulf %45, %40 : vector<16x32xf32>
    %47 = arith.addf %44, %46 : vector<16x32xf32>
    %48 = vector.extract_strided_slice %31 {offsets = [0, 0], sizes = [1, 32], strides = [1, 1]} : vector<3x32xf32> to vector<1x32xf32>
    %49 = vector.shape_cast %48 : vector<1x32xf32> to vector<32xf32>
    %50 = vector.shape_cast %49 : vector<32xf32> to vector<1x32xf32>
    %51 = vector.broadcast %50 : vector<1x32xf32> to vector<16x32xf32>
    %52 = arith.addf %47, %51 : vector<16x32xf32>
    %cst_20 = arith.constant 2.000000e-01 : f32
    %53 = vector.broadcast %cst_20 : f32 to vector<16x32xf32>
    %54 = arith.mulf %53, %52 : vector<16x32xf32>
    %55 = arith.maximumf %52, %54 : vector<16x32xf32>
    %56 = vector.extract_strided_slice %32 {offsets = [0, 0], sizes = [1, 32], strides = [1, 1]} : vector<3x32xf32> to vector<1x32xf32>
    %57 = vector.shape_cast %56 : vector<1x32xf32> to vector<32xf32>
    %58 = vector.shape_cast %57 : vector<32xf32> to vector<1x32xf32>
    %59 = vector.broadcast %58 : vector<1x32xf32> to vector<16x32xf32>
    %60 = arith.mulf %55, %59 : vector<16x32xf32>
    %61 = arith.addf %5, %60 : vector<16x32xf32>
    %62 = vector.extract_strided_slice %33 {offsets = [0, 0], sizes = [1, 32], strides = [1, 1]} : vector<3x32xf32> to vector<1x32xf32>
    %63 = vector.shape_cast %62 : vector<1x32xf32> to vector<32xf32>
    %64 = vector.shape_cast %63 : vector<32xf32> to vector<1x32xf32>
    %65 = vector.broadcast %64 : vector<1x32xf32> to vector<16x32xf32>
    %66 = arith.addf %61, %65 : vector<16x32xf32>
    %c1 = arith.constant 1 : index
    %c0_21 = arith.constant 0 : index
    %c0_22 = arith.constant 0 : index
    %67 = vector.load %arg3[%c1, %c0_21, %c0_22] : memref<3x32x96xf32, #tpu.memory_space<vmem>>, vector<1x32x96xf32>
    %68 = vector.shape_cast %67 : vector<1x32x96xf32> to vector<32x96xf32>
    %cst_23 = arith.constant dense<0.000000e+00> : vector<16x96xf32>
    %69 = tpu.matmul %66, %68, %cst_23 {dimension_numbers = #tpu.dot_dimension_numbers<[1], [0], [0], [1], [0, 0, 1, 1], [], []>} : vector<16x32xf32>, vector<32x96xf32>, vector<16x96xf32> -> vector<16x96xf32>
    %70 = vector.extract_strided_slice %69 {offsets = [0, 0], sizes = [16, 32], strides = [1, 1]} : vector<16x96xf32> to vector<16x32xf32>
    %c1_i32_24 = arith.constant 1 : i32
    %71 = tpu.dynamic_rotate %70 by %c1_i32_24 dim 0 : vector<16x32xf32>, i32 -> vector<16x32xf32>
    %72 = vector.extract_strided_slice %69 {offsets = [0, 64], sizes = [16, 32], strides = [1, 1]} : vector<16x96xf32> to vector<16x32xf32>
    %c15_i32_25 = arith.constant 15 : i32
    %73 = tpu.dynamic_rotate %72 by %c15_i32_25 dim 0 : vector<16x32xf32>, i32 -> vector<16x32xf32>
    %74 = vector.broadcast %26 : vector<16x1xf32> to vector<16x32xf32>
    %75 = arith.mulf %74, %71 : vector<16x32xf32>
    %76 = vector.extract_strided_slice %69 {offsets = [0, 32], sizes = [16, 32], strides = [1, 1]} : vector<16x96xf32> to vector<16x32xf32>
    %77 = arith.addf %75, %76 : vector<16x32xf32>
    %78 = vector.broadcast %30 : vector<16x1xf32> to vector<16x32xf32>
    %79 = arith.mulf %78, %73 : vector<16x32xf32>
    %80 = arith.addf %77, %79 : vector<16x32xf32>
    %81 = vector.extract_strided_slice %31 {offsets = [1, 0], sizes = [1, 32], strides = [1, 1]} : vector<3x32xf32> to vector<1x32xf32>
    %82 = vector.shape_cast %81 : vector<1x32xf32> to vector<32xf32>
    %83 = vector.shape_cast %82 : vector<32xf32> to vector<1x32xf32>
    %84 = vector.broadcast %83 : vector<1x32xf32> to vector<16x32xf32>
    %85 = arith.addf %80, %84 : vector<16x32xf32>
    %cst_26 = arith.constant 2.000000e-01 : f32
    %86 = vector.broadcast %cst_26 : f32 to vector<16x32xf32>
    %87 = arith.mulf %86, %85 : vector<16x32xf32>
    %88 = arith.maximumf %85, %87 : vector<16x32xf32>
    %89 = vector.extract_strided_slice %32 {offsets = [1, 0], sizes = [1, 32], strides = [1, 1]} : vector<3x32xf32> to vector<1x32xf32>
    %90 = vector.shape_cast %89 : vector<1x32xf32> to vector<32xf32>
    %91 = vector.shape_cast %90 : vector<32xf32> to vector<1x32xf32>
    %92 = vector.broadcast %91 : vector<1x32xf32> to vector<16x32xf32>
    %93 = arith.mulf %88, %92 : vector<16x32xf32>
    %94 = arith.addf %66, %93 : vector<16x32xf32>
    %95 = vector.extract_strided_slice %33 {offsets = [1, 0], sizes = [1, 32], strides = [1, 1]} : vector<3x32xf32> to vector<1x32xf32>
    %96 = vector.shape_cast %95 : vector<1x32xf32> to vector<32xf32>
    %97 = vector.shape_cast %96 : vector<32xf32> to vector<1x32xf32>
    %98 = vector.broadcast %97 : vector<1x32xf32> to vector<16x32xf32>
    %99 = arith.addf %94, %98 : vector<16x32xf32>
    %c2 = arith.constant 2 : index
    %c0_27 = arith.constant 0 : index
    %c0_28 = arith.constant 0 : index
    %100 = vector.load %arg3[%c2, %c0_27, %c0_28] : memref<3x32x96xf32, #tpu.memory_space<vmem>>, vector<1x32x96xf32>
    %101 = vector.shape_cast %100 : vector<1x32x96xf32> to vector<32x96xf32>
    %cst_29 = arith.constant dense<0.000000e+00> : vector<16x96xf32>
    %102 = tpu.matmul %99, %101, %cst_29 {dimension_numbers = #tpu.dot_dimension_numbers<[1], [0], [0], [1], [0, 0, 1, 1], [], []>} : vector<16x32xf32>, vector<32x96xf32>, vector<16x96xf32> -> vector<16x96xf32>
    %103 = vector.extract_strided_slice %102 {offsets = [0, 0], sizes = [16, 32], strides = [1, 1]} : vector<16x96xf32> to vector<16x32xf32>
    %c1_i32_30 = arith.constant 1 : i32
    %104 = tpu.dynamic_rotate %103 by %c1_i32_30 dim 0 : vector<16x32xf32>, i32 -> vector<16x32xf32>
    %105 = vector.extract_strided_slice %102 {offsets = [0, 64], sizes = [16, 32], strides = [1, 1]} : vector<16x96xf32> to vector<16x32xf32>
    %c15_i32_31 = arith.constant 15 : i32
    %106 = tpu.dynamic_rotate %105 by %c15_i32_31 dim 0 : vector<16x32xf32>, i32 -> vector<16x32xf32>
    %107 = vector.broadcast %26 : vector<16x1xf32> to vector<16x32xf32>
    %108 = arith.mulf %107, %104 : vector<16x32xf32>
    %109 = vector.extract_strided_slice %102 {offsets = [0, 32], sizes = [16, 32], strides = [1, 1]} : vector<16x96xf32> to vector<16x32xf32>
    %110 = arith.addf %108, %109 : vector<16x32xf32>
    %111 = vector.broadcast %30 : vector<16x1xf32> to vector<16x32xf32>
    %112 = arith.mulf %111, %106 : vector<16x32xf32>
    %113 = arith.addf %110, %112 : vector<16x32xf32>
    %114 = vector.extract_strided_slice %31 {offsets = [2, 0], sizes = [1, 32], strides = [1, 1]} : vector<3x32xf32> to vector<1x32xf32>
    %115 = vector.shape_cast %114 : vector<1x32xf32> to vector<32xf32>
    %116 = vector.shape_cast %115 : vector<32xf32> to vector<1x32xf32>
    %117 = vector.broadcast %116 : vector<1x32xf32> to vector<16x32xf32>
    %118 = arith.addf %113, %117 : vector<16x32xf32>
    %cst_32 = arith.constant 2.000000e-01 : f32
    %119 = vector.broadcast %cst_32 : f32 to vector<16x32xf32>
    %120 = arith.mulf %119, %118 : vector<16x32xf32>
    %121 = arith.maximumf %118, %120 : vector<16x32xf32>
    %122 = vector.extract_strided_slice %32 {offsets = [2, 0], sizes = [1, 32], strides = [1, 1]} : vector<3x32xf32> to vector<1x32xf32>
    %123 = vector.shape_cast %122 : vector<1x32xf32> to vector<32xf32>
    %124 = vector.shape_cast %123 : vector<32xf32> to vector<1x32xf32>
    %125 = vector.broadcast %124 : vector<1x32xf32> to vector<16x32xf32>
    %126 = arith.mulf %121, %125 : vector<16x32xf32>
    %127 = arith.addf %99, %126 : vector<16x32xf32>
    %128 = vector.extract_strided_slice %33 {offsets = [2, 0], sizes = [1, 32], strides = [1, 1]} : vector<3x32xf32> to vector<1x32xf32>
    %129 = vector.shape_cast %128 : vector<1x32xf32> to vector<32xf32>
    %130 = vector.shape_cast %129 : vector<32xf32> to vector<1x32xf32>
    %131 = vector.broadcast %130 : vector<1x32xf32> to vector<16x32xf32>
    %132 = arith.addf %127, %131 : vector<16x32xf32>
    %c0_33 = arith.constant 0 : index
    %c0_34 = arith.constant 0 : index
    %133 = vector.load %arg7[%c0_33, %c0_34] : memref<1x32xf32, #tpu.memory_space<vmem>>, vector<1x32xf32>
    %134 = vector.broadcast %133 : vector<1x32xf32> to vector<16x32xf32>
    %135 = arith.mulf %132, %134 : vector<16x32xf32>
    %cst_35 = arith.constant dense<0.000000e+00> : vector<16xf32>
    %136 = vector.multi_reduction <add>, %135, %cst_35 [1] : vector<16x32xf32> to vector<16xf32>
    %137 = vector.shape_cast %136 : vector<16xf32> to vector<16x1xf32>
    %c0_36 = arith.constant 0 : index
    %c0_37 = arith.constant 0 : index
    %138 = vector.load %arg8[%c0_36, %c0_37] : memref<1x1xf32, #tpu.memory_space<vmem>>, vector<1x1xf32>
    %139 = vector.broadcast %138 : vector<1x1xf32> to vector<16x1xf32>
    %140 = arith.addf %137, %139 : vector<16x1xf32>
    %141 = arith.negf %140 : vector<16x1xf32>
    %142 = math.exp %141 : vector<16x1xf32>
    %cst_38 = arith.constant 1.000000e+00 : f32
    %143 = vector.broadcast %cst_38 : f32 to vector<16x1xf32>
    %144 = arith.addf %143, %142 : vector<16x1xf32>
    %145 = arith.divf %143, %144 : vector<16x1xf32>
    %c0_39 = arith.constant 0 : index
    %c0_40 = arith.constant 0 : index
    %146 = vector.load %arg9[%c0_39, %c0_40] : memref<16x1xf32, #tpu.memory_space<vmem>>, vector<16x1xf32>
    tpu.vector_store %arg9[%c0_39, %c0_40], %145 {strides = array<i32>} : memref<16x1xf32, #tpu.memory_space<vmem>>, vector<16x1xf32>,
    return
  }
}

</mosaic_0001>

<llo_original>
// kernel: tpu_custom_call.1
$region0: #{tpu_custom_call.1}
  #allocation0 [shape = 'u32[]', space=smem, size = 0x4, offset = 0x4, fixed_abs, tag = 'smem constant byte address 0x4 - core index']
  #allocation1 [shape = 'u32[72,128]{1,0:T(1,128)}', space=vmem, size = 0x9000, scoped, tag = 'internal scratch']
  #allocation2 [shape = 'f32[1,1]{1,0:T(1,128)S(1)}', space=vmem, size = 0x200, scoped, tag = 'scoped memory for tpu_custom_call.1']
  %s0 = inlined_call_operand.hbm [shape: f32[16,16], index: 0, kind: input, shape index: {}]
  %s1 = inlined_call_operand.hbm [shape: f32[16,32], index: 1, kind: input, shape index: {}]
  %s2 = inlined_call_operand.vmem [shape: f32[1,32], index: 2, kind: input, shape index: {}]
  %s3 = inlined_call_operand.hbm [shape: f32[3,32,96], index: 3, kind: input, shape index: {}]
  %s4 = inlined_call_operand.vmem [shape: f32[3,32], index: 4, kind: input, shape index: {}]
  %s5 = inlined_call_operand.hbm [shape: f32[3,32], index: 5, kind: input, shape index: {}]
  %s6 = inlined_call_operand.hbm [shape: f32[3,32], index: 6, kind: input, shape index: {}]
  %s7 = inlined_call_operand.vmem [shape: f32[1,32], index: 7, kind: input, shape index: {}]
  %s8 = inlined_call_operand.<no memory space> [shape: f32[1,1], index: 8, kind: input, shape index: {}]
  %s9 = inlined_call_operand.vmem [shape: f32[16,1], index: 9, kind: output, shape index: {}]
  %s10 = sld [smem:[#allocation0]]
  $region66: #{tpu_custom_call.1} parent=0
    _
  %s12 = ssub.s32 1, %s10
  %s13 = scalar_select 0, %s12, %s10
  %v14 = vstv %s8
  %15 = vst [vmem:[#allocation2] sm:$0x1] %v14
  $region1: #{tpu_custom_call.1} parent=0
    #allocation3 [shape = 'u8[8192]{0}', space=vmem, size = 0x2000, scoped, tag = 'input window, operand 0, single buffered']
    #allocation4 [shape = 's32[1]{0}', space=sflag, size = 0x4, scoped, tag = 'scoped memory for tpu_custom_call.1']
    #allocation5 [shape = 'u8[8192]{0}', space=vmem, size = 0x2000, scoped, tag = 'input window, operand 1, single buffered']
    #allocation6 [shape = 's32[1]{0}', space=sflag, size = 0x4, scoped, tag = 'scoped memory for tpu_custom_call.1']
    #allocation7 [shape = 'u8[49152]{0}', space=vmem, size = 0xc000, scoped, tag = 'input window, operand 3, single buffered']
    #allocation8 [shape = 'u8[2048]{0}', space=vmem, size = 0x800, scoped, tag = 'input window, operand 5, single buffered']
    #allocation9 [shape = 's32[1]{0}', space=sflag, size = 0x4, scoped, tag = 'scoped memory for tpu_custom_call.1']
    #allocation10 [shape = 'u8[2048]{0}', space=vmem, size = 0x800, scoped, tag = 'input window, operand 6, single buffered']
    %16 = vsyncpa [#allocation4], 0
    %17 = vsyncpa [#allocation6], 0
    %18 = vsyncpa [#allocation9], 0
    // Predicated region
    $region2: #{tpu_custom_call.1} parent=1 // pred_check
      _
    $region3: #{tpu_custom_call.1} parent=1 // pred_check_branch
      %20 = sbr.rel (0) target = $region5
    $region4: #{tpu_custom_call.1} parent=1 // pred_region
      %22 = vsyncadd [#allocation4], 0
      %s23 = sshll.u32 %s0, 4
      %s24 = int_to_ptr.hbm [resolvable:$true] %s23
      %s25 = sshll.u32 [#allocation3], 4
      %s26 = int_to_ptr.vmem [resolvable:$true] %s25
      %31 = dma.hbm_to_vmem [thread:$0]  %s24, 256, %s26, [#allocation4], 128, 128, 8
    $region5: #{tpu_custom_call.1} parent=1 // pred_fallthru
      _
    // Predicated region
    $region6: #{tpu_custom_call.1} parent=1 // pred_check
      _
    $region7: #{tpu_custom_call.1} parent=1 // pred_check_branch
      %33 = sbr.rel (0) target = $region9
    $region8: #{tpu_custom_call.1} parent=1 // pred_region
      %35 = vsyncadd [#allocation6], 0
      %s36 = sshll.u32 %s1, 4
      %s37 = int_to_ptr.hbm [resolvable:$true] %s36
      %s38 = sshll.u32 [#allocation5], 4
      %s39 = int_to_ptr.vmem [resolvable:$true] %s38
      %44 = dma.hbm_to_vmem [thread:$0]  %s37, 256, %s39, [#allocation6], 128, 128, 8
    $region9: #{tpu_custom_call.1} parent=1 // pred_fallthru
      _
    // Predicated region
    $region10: #{tpu_custom_call.1} parent=1 // pred_check
      _
    $region11: #{tpu_custom_call.1} parent=1 // pred_check_branch
      %46 = sbr.rel (0) target = $region13
    $region12: #{tpu_custom_call.1} parent=1 // pred_region
      _
    $region13: #{tpu_custom_call.1} parent=1 // pred_fallthru
      _
    // Predicated region
    $region14: #{tpu_custom_call.1} parent=1 // pred_check
      _
    $region15: #{tpu_custom_call.1} parent=1 // pred_check_branch
      %48 = sbr.rel (0) target = $region17
    $region16: #{tpu_custom_call.1} parent=1 // pred_region
      %50 = vsyncadd [#allocation6], 0
      %s51 = sshll.u32 %s3, 4
      %s52 = int_to_ptr.hbm [resolvable:$true] %s51
      %s53 = sshll.u32 [#allocation7], 4
      %s54 = int_to_ptr.vmem [resolvable:$true] %s53
      %59 = dma.hbm_to_vmem [thread:$0]  %s52, 1536, %s54, [#allocation6], 128, 128, 8
    $region17: #{tpu_custom_call.1} parent=1 // pred_fallthru
      _
    // Predicated region
    $region18: #{tpu_custom_call.1} parent=1 // pred_check
      _
    $region19: #{tpu_custom_call.1} parent=1 // pred_check_branch
      %61 = sbr.rel (0) target = $region21
    $region20: #{tpu_custom_call.1} parent=1 // pred_region
      _
    $region21: #{tpu_custom_call.1} parent=1 // pred_fallthru
      _
    // Predicated region
    $region22: #{tpu_custom_call.1} parent=1 // pred_check
      _
    $region23: #{tpu_custom_call.1} parent=1 // pred_check_branch
      %63 = sbr.rel (0) target = $region25
    $region24: #{tpu_custom_call.1} parent=1 // pred_region
      %65 = vsyncadd [#allocation9], 0
      %s67 = sshll.u32 %s5, 4
      %s68 = int_to_ptr.hbm [resolvable:$true] %s67
      %s69 = sshll.u32 [#allocation8], 4
      %s70 = int_to_ptr.vmem [resolvable:$true] %s69
      %72 = dma.hbm_to_vmem [thread:$0]  %s68, 64, %s70, [#allocation9]
    $region25: #{tpu_custom_call.1} parent=1 // pred_fallthru
      _
    // Predicated region
    $region26: #{tpu_custom_call.1} parent=1 // pred_check
      _
    $region27: #{tpu_custom_call.1} parent=1 // pred_check_branch
      %74 = sbr.rel (0) target = $region29
    $region28: #{tpu_custom_call.1} parent=1 // pred_region
      %76 = vsyncadd [#allocation9], 0
      %s78 = sshll.u32 %s6, 4
      %s79 = int_to_ptr.hbm [resolvable:$true] %s78
      %s80 = sshll.u32 [#allocation10], 4
      %s81 = int_to_ptr.vmem [resolvable:$true] %s80
      %83 = dma.hbm_to_vmem [thread:$0]  %s79, 64, %s81, [#allocation9]
    $region29: #{tpu_custom_call.1} parent=1 // pred_fallthru
      _
    // Predicated region
    $region30: #{tpu_custom_call.1} parent=1 // pred_check
      _
    $region31: #{tpu_custom_call.1} parent=1 // pred_check_branch
      %85 = sbr.rel (0) target = $region33
    $region32: #{tpu_custom_call.1} parent=1 // pred_region
      _
    $region33: #{tpu_custom_call.1} parent=1 // pred_fallthru
      _
    // Predicated region
    $region34: #{tpu_custom_call.1} parent=1 // pred_check
      _
    $region35: #{tpu_custom_call.1} parent=1 // pred_check_branch
      %87 = sbr.rel (0) target = $region37
    $region36: #{tpu_custom_call.1} parent=1 // pred_region
      _
    $region37: #{tpu_custom_call.1} parent=1 // pred_fallthru
      _
    // Predicated region
    $region38: #{tpu_custom_call.1} parent=1 // pred_check
      _
    $region39: #{tpu_custom_call.1} parent=1 // pred_check_branch
      %89 = sbr.rel (0) target = $region41
    $region40: #{tpu_custom_call.1} parent=1 // pred_region
      %91 = dma.done [#allocation4], 256
    $region41: #{tpu_custom_call.1} parent=1 // pred_fallthru
      _
    // Predicated region
    $region42: #{tpu_custom_call.1} parent=1 // pred_check
      _
    $region43: #{tpu_custom_call.1} parent=1 // pred_check_branch
      %93 = sbr.rel (0) target = $region45
    $region44: #{tpu_custom_call.1} parent=1 // pred_region
      %95 = dma.done [#allocation6], 256
    $region45: #{tpu_custom_call.1} parent=1 // pred_fallthru
      _
    // Predicated region
    $region46: #{tpu_custom_call.1} parent=1 // pred_check
      _
    $region47: #{tpu_custom_call.1} parent=1 // pred_check_branch
      %97 = sbr.rel (0) target = $region49
    $region48: #{tpu_custom_call.1} parent=1 // pred_region
      %99 = dma.done [#allocation6], 1536
    $region49: #{tpu_custom_call.1} parent=1 // pred_fallthru
      _
    // Predicated region
    $region50: #{tpu_custom_call.1} parent=1 // pred_check
      _
    $region51: #{tpu_custom_call.1} parent=1 // pred_check_branch
      %101 = sbr.rel (0) target = $region53
    $region52: #{tpu_custom_call.1} parent=1 // pred_region
      %103 = dma.done [#allocation9], 64
    $region53: #{tpu_custom_call.1} parent=1 // pred_fallthru
      _
    // Predicated region
    $region54: #{tpu_custom_call.1} parent=1 // pred_check
      _
    $region55: #{tpu_custom_call.1} parent=1 // pred_check_branch
      %105 = sbr.rel (0) target = $region57
    $region56: #{tpu_custom_call.1} parent=1 // pred_region
      %107 = dma.done [#allocation9], 64
    $region57: #{tpu_custom_call.1} parent=1 // pred_fallthru
      _
    %v108 = vld [vmem:[#allocation3] sm:$0xff]
    %v109 = vld [vmem:[#allocation3 + $0x8] sm:$0xff]
    %v110 = vld [vmem:[#allocation5] sm:$0xff]
    %v111 = vld [vmem:[#allocation5 + $0x8] sm:$0xff]
    %v112 = vld [vmem:[%s2] sm:$0x1]
    %v114 = vperm.slane %v112, 0
    %vm116 = vcmask 130048
    %v118 = vsel %vm116, %v108, 0
    %v121 = vsel %vm116, %v109, 0
    %123 = vmatpush.msra.mxu0 0.0
    %124 = vmatpush.msra.mxu0 0.0
    %125 = vmatpush.msra.mxu0 0.0
    %126 = vmatpush.msra.mxu0 0.0
    %127 = vmatpush.msra.mxu0 0.0
    %128 = vmatpush.msra.mxu0 0.0
    %129 = vmatpush.msra.mxu0 0.0
    %130 = vmatpush.msra.mxu0 0.0
    %131 = vmatpush.msra.mxu0 0.0
    %132 = vmatpush.msra.mxu0 0.0
    %133 = vmatpush.msra.mxu0 0.0
    %134 = vmatpush.msra.mxu0 0.0
    %135 = vmatpush.msra.mxu0 0.0
    %136 = vmatpush.msra.mxu0 0.0
    %137 = vmatpush.msra.mxu0 %v111
    %138 = vmatpush.msra.mxu0 %v110
    %139 = vmatmul.f32.gmra.mxu0 %v118
    %v140 = vpop.f32.mrf.mxu0
    %v141 = vadd.f32 %v114, %v140
    %142 = vmatmul.f32.gmra.mxu0 %v121
    %v143 = vpop.f32.mrf.mxu0
    %v144 = vadd.f32 %v114, %v143
    %145 = vdwg.mxu0
    %v146 = vlaneseq
    %v147 = vshrl.u32 %v146, 7
    %v148 = vadd.s32 %v147, 8
    %vm149 = vcmp.lt.s32.totalorder %v147, 0
    %v150 = vsub.s32 0, %v147
    %v151 = vsel %vm149, %v150, %v147
    %v152 = vshrl.u32 %v151, 3
    %v153 = vand.u32 %v151, 7
    %v154 = vsub.s32 0, %v153
    %v155 = vsel %vm149, %v154, %v153
    %vm156 = vcmp.lt.s32.totalorder %v148, 0
    %v157 = vsub.s32 0, %v148
    %v158 = vsel %vm156, %v157, %v148
    %v159 = vshrl.u32 %v158, 3
    %v160 = vand.u32 %v158, 7
    %v161 = vsub.s32 0, %v160
    %v162 = vsel %vm156, %v161, %v160
    %vm163 = vcmp.ne.s32.totalorder %v155, 0
    %vm164 = vcmp.ne.s32.totalorder %v162, 0
    %vm165 = vcmp.lt.s32.totalorder %v155, 0
    %vm166 = vcmp.lt.s32.totalorder %v162, 0
    %vm167 = vmand %vm165, %vm163
    %vm168 = vmand %vm166, %vm164
    %v169 = vadd.s32 %v155, 8
    %v170 = vadd.s32 %v162, 8
    %v171 = vsel %vm167, %v169, %v155
    %v172 = vsel %vm168, %v170, %v162
    %vm173 = vcmp.ne.s32.totalorder %v171, 0
    %vm174 = vcmp.ne.s32.totalorder %v172, 0
    %v175 = vsel %vm173, 1, 0
    %v176 = vsel %vm174, 1, 0
    %v177 = vcvt.s32.f32 %v175
    %v178 = vcvt.s32.f32 %v176
    %vm179 = vcmp.ne.s32.totalorder %v171, 7
    %vm180 = vcmp.ne.s32.totalorder %v172, 7
    %v181 = vsel %vm179, 1, 0
    %v182 = vsel %vm180, 1, 0
    %v183 = vcvt.s32.f32 %v181
    %v184 = vcvt.s32.f32 %v182
    %v185 = vld [vmem:[%s4] sm:$0x7]
    %v186 = vld [vmem:[#allocation8] sm:$0x7]
    %v187 = vld [vmem:[#allocation10] sm:$0x7]
    %v188 = vld [vmem:[#allocation7] sm:$0xff]
    %v189 = vld [vmem:[#allocation7 + $0x8] sm:$0xff]
    %v190 = vld [vmem:[#allocation7 + $0x10] sm:$0xff]
    %v191 = vld [vmem:[#allocation7 + $0x18] sm:$0xff]
    %vm192 = vcmask 261120
    %v194 = vsel %vm192, %v141, 0
    %v197 = vsel %vm192, %v144, 0
    %199 = vmatpush.msra.mxu0 0.0
    %200 = vmatpush.msra.mxu0 0.0
    %201 = vmatpush.msra.mxu0 0.0
    %202 = vmatpush.msra.mxu0 0.0
    %203 = vmatpush.msra.mxu0 0.0
    %204 = vmatpush.msra.mxu0 0.0
    %205 = vmatpush.msra.mxu0 0.0
    %206 = vmatpush.msra.mxu0 0.0
    %207 = vmatpush.msra.mxu0 0.0
    %208 = vmatpush.msra.mxu0 0.0
    %209 = vmatpush.msra.mxu0 0.0
    %210 = vmatpush.msra.mxu0 0.0
    %211 = vmatpush.msra.mxu0 %v191
    %212 = vmatpush.msra.mxu0 %v190
    %213 = vmatpush.msra.mxu0 %v189
    %214 = vmatpush.msra.mxu0 %v188
    %215 = vmatmul.f32.gmra.mxu0 %v194
    %v216 = vpop.f32.mrf.mxu0
    %v217 = vadd.f32 0.0, %v216
    %218 = vmatmul.f32.gmra.mxu0 %v197
    %v219 = vpop.f32.mrf.mxu0
    %v220 = vadd.f32 0.0, %v219
    %221 = vdwg.mxu0
    %v222 = vrot.slane %v217, 7
    %v223 = vrot.slane %v220, 7
    %vm224 = vcmp.lt.s32.totalorder %v147, 1
    %v225 = vsel %vm224, %v222, %v223
    %v226 = vsel %vm224, %v223, %v222
    %229 = vrot.lane.b32.xlu0 %v217, 64
    %v230 = vpop.permute.xlu0 %229
    %231 = vrot.lane.b32.xlu0 %v220, 64
    %v232 = vpop.permute.xlu0 %231
    %v235 = vrot.slane %v230, 1
    %v236 = vrot.slane %v232, 1
    %vm237 = vcmp.lt.s32.totalorder %v147, 7
    %v238 = vsel %vm237, %v235, %v236
    %v239 = vsel %vm237, %v236, %v235
    %v240 = vmul.f32 %v177, %v226
    %v241 = vmul.f32 %v178, %v225
    %242 = vrot.lane.b32.xlu0 %v217, 96
    %v243 = vpop.permute.xlu0 %242
    %244 = vrot.lane.b32.xlu0 %v220, 96
    %v245 = vpop.permute.xlu0 %244
    %v248 = vadd.f32 %v240, %v243
    %v249 = vadd.f32 %v241, %v245
    %v250 = vmul.f32 %v183, %v238
    %v251 = vmul.f32 %v184, %v239
    %v252 = vadd.f32 %v248, %v250
    %v253 = vadd.f32 %v249, %v251
    %v254 = vperm.slane %v185, 0
    %v255 = vadd.f32 %v252, %v254
    %v256 = vadd.f32 %v253, %v254
    %v257 = vmul.f32 %v255, 0.2
    %v258 = vmul.f32 %v256, 0.2
    %v259 = vmax.f32 %v255, %v257
    %v260 = vmax.f32 %v256, %v258
    %v261 = vperm.slane %v186, 0
    %v262 = vmul.f32 %v259, %v261
    %v263 = vmul.f32 %v260, %v261
    %v264 = vadd.f32 %v141, %v262
    %v265 = vadd.f32 %v144, %v263
    %v266 = vperm.slane %v187, 0
    %v267 = vadd.f32 %v264, %v266
    %v268 = vadd.f32 %v265, %v266
    %s269 = scalar_lea.vmem [#allocation7], 32
    %v270 = vld [vmem:[%s269] sm:$0xff]
    %v271 = vld [vmem:[%s269 + $0x8] sm:$0xff]
    %v272 = vld [vmem:[%s269 + $0x10] sm:$0xff]
    %v273 = vld [vmem:[%s269 + $0x18] sm:$0xff]
    %v275 = vsel %vm192, %v267, 0
    %v278 = vsel %vm192, %v268, 0
    %280 = vmatpush.msra.mxu0 0.0
    %281 = vmatpush.msra.mxu0 0.0
    %282 = vmatpush.msra.mxu0 0.0
    %283 = vmatpush.msra.mxu0 0.0
    %284 = vmatpush.msra.mxu0 0.0
    %285 = vmatpush.msra.mxu0 0.0
    %286 = vmatpush.msra.mxu0 0.0
    %287 = vmatpush.msra.mxu0 0.0
    %288 = vmatpush.msra.mxu0 0.0
    %289 = vmatpush.msra.mxu0 0.0
    %290 = vmatpush.msra.mxu0 0.0
    %291 = vmatpush.msra.mxu0 0.0
    %292 = vmatpush.msra.mxu0 %v273
    %293 = vmatpush.msra.mxu0 %v272
    %294 = vmatpush.msra.mxu0 %v271
    %295 = vmatpush.msra.mxu0 %v270
    %296 = vmatmul.f32.gmra.mxu0 %v275
    %v297 = vpop.f32.mrf.mxu0
    %v298 = vadd.f32 0.0, %v297
    %299 = vmatmul.f32.gmra.mxu0 %v278
    %v300 = vpop.f32.mrf.mxu0
    %v301 = vadd.f32 0.0, %v300
    %302 = vdwg.mxu0
    %v303 = vrot.slane %v298, 7
    %v304 = vrot.slane %v301, 7
    %v305 = vsel %vm224, %v303, %v304
    %v306 = vsel %vm224, %v304, %v303
    %309 = vrot.lane.b32.xlu0 %v298, 64
    %v310 = vpop.permute.xlu0 %309
    %311 = vrot.lane.b32.xlu0 %v301, 64
    %v312 = vpop.permute.xlu0 %311
    %v315 = vrot.slane %v310, 1
    %v316 = vrot.slane %v312, 1
    %v317 = vsel %vm237, %v315, %v316
    %v318 = vsel %vm237, %v316, %v315
    %v319 = vmul.f32 %v177, %v306
    %v320 = vmul.f32 %v178, %v305
    %321 = vrot.lane.b32.xlu0 %v298, 96
    %v322 = vpop.permute.xlu0 %321
    %323 = vrot.lane.b32.xlu0 %v301, 96
    %v324 = vpop.permute.xlu0 %323
    %v327 = vadd.f32 %v319, %v322
    %v328 = vadd.f32 %v320, %v324
    %v329 = vmul.f32 %v183, %v317
    %v330 = vmul.f32 %v184, %v318
    %v331 = vadd.f32 %v327, %v329
    %v332 = vadd.f32 %v328, %v330
    %v333 = vperm.slane %v185, 1
    %v334 = vadd.f32 %v331, %v333
    %v335 = vadd.f32 %v332, %v333
    %v336 = vmul.f32 %v334, 0.2
    %v337 = vmul.f32 %v335, 0.2
    %v338 = vmax.f32 %v334, %v336
    %v339 = vmax.f32 %v335, %v337
    %v340 = vperm.slane %v186, 1
    %v341 = vmul.f32 %v338, %v340
    %v342 = vmul.f32 %v339, %v340
    %v343 = vadd.f32 %v267, %v341
    %v344 = vadd.f32 %v268, %v342
    %v345 = vperm.slane %v187, 1
    %v346 = vadd.f32 %v343, %v345
    %v347 = vadd.f32 %v344, %v345
    %s348 = scalar_lea.vmem [#allocation7], 64
    %v349 = vld [vmem:[%s348] sm:$0xff]
    %v350 = vld [vmem:[%s348 + $0x8] sm:$0xff]
    %v351 = vld [vmem:[%s348 + $0x10] sm:$0xff]
    %v352 = vld [vmem:[%s348 + $0x18] sm:$0xff]
    %v354 = vsel %vm192, %v346, 0
    %v357 = vsel %vm192, %v347, 0
    %359 = vmatpush.msra.mxu0 0.0
    %360 = vmatpush.msra.mxu0 0.0
    %361 = vmatpush.msra.mxu0 0.0
    %362 = vmatpush.msra.mxu0 0.0
    %363 = vmatpush.msra.mxu0 0.0
    %364 = vmatpush.msra.mxu0 0.0
    %365 = vmatpush.msra.mxu0 0.0
    %366 = vmatpush.msra.mxu0 0.0
    %367 = vmatpush.msra.mxu0 0.0
    %368 = vmatpush.msra.mxu0 0.0
    %369 = vmatpush.msra.mxu0 0.0
    %370 = vmatpush.msra.mxu0 0.0
    %371 = vmatpush.msra.mxu0 %v352
    %372 = vmatpush.msra.mxu0 %v351
    %373 = vmatpush.msra.mxu0 %v350
    %374 = vmatpush.msra.mxu0 %v349
    %375 = vmatmul.f32.gmra.mxu0 %v354
    %v376 = vpop.f32.mrf.mxu0
    %v377 = vadd.f32 0.0, %v376
    %378 = vmatmul.f32.gmra.mxu0 %v357
    %v379 = vpop.f32.mrf.mxu0
    %v380 = vadd.f32 0.0, %v379
    %381 = vdwg.mxu0
    %v382 = vrot.slane %v377, 7
    %v383 = vrot.slane %v380, 7
    %v384 = vsel %vm224, %v382, %v383
    %v385 = vsel %vm224, %v383, %v382
    %388 = vrot.lane.b32.xlu0 %v377, 64
    %v389 = vpop.permute.xlu0 %388
    %390 = vrot.lane.b32.xlu0 %v380, 64
    %v391 = vpop.permute.xlu0 %390
    %v394 = vrot.slane %v389, 1
    %v395 = vrot.slane %v391, 1
    %v396 = vsel %vm237, %v394, %v395
    %v397 = vsel %vm237, %v395, %v394
    %v398 = vmul.f32 %v177, %v385
    %v399 = vmul.f32 %v178, %v384
    %400 = vrot.lane.b32.xlu0 %v377, 96
    %v401 = vpop.permute.xlu0 %400
    %402 = vrot.lane.b32.xlu0 %v380, 96
    %v403 = vpop.permute.xlu0 %402
    %v406 = vadd.f32 %v398, %v401
    %v407 = vadd.f32 %v399, %v403
    %v408 = vmul.f32 %v183, %v396
    %v409 = vmul.f32 %v184, %v397
    %v410 = vadd.f32 %v406, %v408
    %v411 = vadd.f32 %v407, %v409
    %v412 = vperm.slane %v185, 2
    %v413 = vadd.f32 %v410, %v412
    %v414 = vadd.f32 %v411, %v412
    %v415 = vmul.f32 %v413, 0.2
    %v416 = vmul.f32 %v414, 0.2
    %v417 = vmax.f32 %v413, %v415
    %v418 = vmax.f32 %v414, %v416
    %v419 = vperm.slane %v186, 2
    %v420 = vmul.f32 %v417, %v419
    %v421 = vmul.f32 %v418, %v419
    %v422 = vadd.f32 %v346, %v420
    %v423 = vadd.f32 %v347, %v421
    %v424 = vperm.slane %v187, 2
    %v425 = vadd.f32 %v422, %v424
    %v426 = vadd.f32 %v423, %v424
    %v427 = vld [vmem:[%s7] sm:$0x1]
    %v429 = vperm.slane %v427, 0
    %v431 = vmul.f32 %v425, %v429
    %v432 = vmul.f32 %v426, %v429
    %v433 = vsel %vm192, %v431, 0.0
    %434 = vadd.xlane.f32.xlu0 %v433
    %v435 = vpop.xlane.xlu0 %434
    %v436 = vsel %vm192, %v432, 0.0
    %437 = vadd.xlane.f32.xlu0 %v436
    %v438 = vpop.xlane.xlu0 %437
    %v439 = vld [vmem:[#allocation2] sm:$0x1]
    %v441 = vperm.slane %v439, 0
    %v443 = vadd.f32 %v435, %v441
    %v444 = vadd.f32 %v438, %v441
    %v445 = vxor.u32 %v443, 2147483648
    %v446 = vxor.u32 %v444, 2147483648
    %v447 = vmul.f32 %v445, 1.442695
    %v448 = vpow.pop %v447
    %v449 = vmul.f32 %v446, 1.442695
    %v450 = vpow.pop %v449
    %v451 = vadd.f32 %v448, 1.0
    %v452 = vadd.f32 %v450, 1.0
    %v453 = vrcp.pop %v451
    %v454 = vmul.f32 %v451, %v453
    %v455 = vsub.f32 1.0, %v454
    %v456 = vmul.f32 %v453, %v455
    %v457 = vadd.f32 %v453, %v456
    %vm458 = vweird.f32 %v451
    %vm459 = vweird.f32 %v453
    %vm460 = vmor %vm458, %vm459
    %v461 = vsel %vm460, %v453, %v457
    %v462 = vand.u32 2147483647, %v451
    %vm463 = vcmp.eq.f32.partialorder %v462, 8.507059e+37
    %v464 = vand.u32 %v451, 2147483648
    %v465 = vor.u32 1.1754944e-38, %v464
    %v466 = vsel %vm463, %v465, %v461
    %v467 = vmul.f32 1.0, %v466
    %v468 = vrcp.pop %v452
    %v469 = vmul.f32 %v452, %v468
    %v470 = vsub.f32 1.0, %v469
    %v471 = vmul.f32 %v468, %v470
    %v472 = vadd.f32 %v468, %v471
    %vm473 = vweird.f32 %v452
    %vm474 = vweird.f32 %v468
    %vm475 = vmor %vm473, %vm474
    %v476 = vsel %vm475, %v468, %v472
    %v477 = vand.u32 2147483647, %v452
    %vm478 = vcmp.eq.f32.partialorder %v477, 8.507059e+37
    %v479 = vand.u32 %v452, 2147483648
    %v480 = vor.u32 1.1754944e-38, %v479
    %v481 = vsel %vm478, %v480, %v476
    %v482 = vmul.f32 1.0, %v481
    %vm483 = vcmask 7168
    %484 = vst.msk [vmem:[%s9] sm:$0xff] %vm483, %v467
    %485 = vst.msk [vmem:[%s9 + $0x8] sm:$0xff] %vm483, %v482
    // Predicated region
    $region58: #{tpu_custom_call.1} parent=1 // pred_check
      _
    $region59: #{tpu_custom_call.1} parent=1 // pred_check_branch
      %487 = sbr.rel (0) target = $region61
    $region60: #{tpu_custom_call.1} parent=1 // pred_region
      _
    $region61: #{tpu_custom_call.1} parent=1 // pred_fallthru
      _
    // Predicated region
    $region62: #{tpu_custom_call.1} parent=1 // pred_check
      _
    $region63: #{tpu_custom_call.1} parent=1 // pred_check_branch
      %489 = sbr.rel (0) target = $region65
    $region64: #{tpu_custom_call.1} parent=1 // pred_region
      _
    $region65: #{tpu_custom_call.1} parent=1 // pred_fallthru
      _
    %490 = vsyncpa [#allocation4], 1
    %491 = vsyncpa [#allocation6], 1
    %492 = vsyncpa [#allocation9], 1

</llo_original>
